<compile_context>
chip_gen: v7x
topology: tpu7x:2x2x1
jax: 0.10.0
libtpu: 0.0.40
codegen_flags: <defaults>
</compile_context>

<pallas_src>
import functools
import math

import jax
import jax.numpy as jnp
from jax.experimental import pallas as pl
from jax.experimental.pallas import tpu as pltpu


_ROW_ALIGN = 32                # multiple of 8 (f32), 16 (bf16) and 32 (u8) sublane packing
_TILE_BUDGET_BYTES = 32 << 20  # target for the sum of all double-buffered tiles
_VMEM_LIMIT_BYTES = 48 << 20   # scoped VMEM request, safe on v5e / v6e / v7x


# ----------------------------------------------------------------------------
# Sinusoidal table (plain JAX glue), identical to the PyTorch buffer.
# ----------------------------------------------------------------------------
def make_positional_encoding_table(d_model: int, max_len: int = 5000) -> jnp.ndarray:
    position = jnp.arange(0, max_len, dtype=jnp.float32)[:, None]            # [max_len, 1]
    div_term = jnp.exp(
        jnp.arange(0, d_model, 2, dtype=jnp.float32) * (-math.log(10000.0) / d_model)
    )                                                                         # [d_model/2]
    pe = jnp.zeros((max_len, d_model), dtype=jnp.float32)
    pe = pe.at[:, 0::2].set(jnp.sin(position * div_term))
    pe = pe.at[:, 1::2].set(jnp.cos(position * div_term))
    return pe                                                                 # [max_len, d_model]


# ----------------------------------------------------------------------------
# Kernels.  Blocks are 2-D (tile_rows, lanes); the batch dim is squeezed away.
# ----------------------------------------------------------------------------
def _add_pe_kernel(x_ref, pe_ref, o_ref):
    o_ref[...] = (x_ref[...] + pe_ref[...]).astype(o_ref.dtype)


def _add_pe_dropout_prng_kernel(seed_ref, x_ref, pe_ref, o_ref, *, keep_thr, scale):
    # In-kernel PRNG: mix the user seed with the grid position so every
    # (row-tile, batch) block draws a decorrelated stream.  No bits from HBM.
    pltpu.prng_seed(seed_ref[0], pl.program_id(0), pl.program_id(1))
    bits = pltpu.bitcast(pltpu.prng_random_bits(x_ref.shape), jnp.uint32)
    # Reduce to 24 random bits and compare as int32 so the comparison is
    # sign-safe for any dropout probability (keep iff u24 < (1-p) * 2^24).
    keep = (bits >> 8).astype(jnp.int32) < keep_thr
    y = x_ref[...].astype(jnp.float32) + pe_ref[...].astype(jnp.float32)
    o_ref[...] = jnp.where(keep, y * scale, 0.0).astype(o_ref.dtype)


def _add_pe_dropout_bits_kernel(x_ref, pe_ref, bits_ref, o_ref, *, keep_thr, scale):
    # Fallback: uint8 random bits streamed from HBM (4x less traffic than the
    # old uint32 stream).  Zero-extend to int32 -> unsigned-safe compare.
    keep = bits_ref[...].astype(jnp.int32) < keep_thr
    y = x_ref[...].astype(jnp.float32) + pe_ref[...].astype(jnp.float32)
    o_ref[...] = jnp.where(keep, y * scale, 0.0).astype(o_ref.dtype)


# ----------------------------------------------------------------------------
# Layout / tiling helpers.
# ----------------------------------------------------------------------------
def _fold_layout(S: int, D: int):
    """Pick a (rows, lanes) 2-D view of the trailing (S, D) dims whose last dim
    is a multiple of 128, so output stores are lane-dense (no masked vst)."""
    if D % 128 == 0:
        return S, D, False
    n = S * D
    for lanes in (1024, 512, 256):
        if n % lanes == 0 and (n // lanes) >= 8:
            return n // lanes, lanes, True
    if n % 128 == 0:
        return n // 128, 128, True
    # TODO(synk): pad D up to a multiple of 128 when S*D is not 128-divisible;
    # for now fall back to the natural layout (masked partial stores).
    return S, D, False


def _pick_tile_rows(rows: int, lanes: int, x_itemsize: int, bits_itemsize: int = 0) -> int:
    """Largest row tile whose *total* double-buffered working set (x in + out +
    pe [+ bits]) fits the tile budget; multiple of 32 rows unless full."""
    per_row = 2 * lanes * (3 * x_itemsize + bits_itemsize)
    t = max(1, _TILE_BUDGET_BYTES // per_row)
    if t >= rows:
        return rows
    return min(rows, max(_ROW_ALIGN, (t // _ROW_ALIGN) * _ROW_ALIGN))


# ----------------------------------------------------------------------------
# Wrapper
# ----------------------------------------------------------------------------
def positional_encoding(x, pe, *, p: float = 0.3, training: bool = True,
                        rng_key=None, rng_impl=None):
    """dropout(x + pe[:S], p).  x: [B, S, D], pe: [max_len, D].

    rng_impl: None (auto) | "pallas" (in-kernel PRNG) | "hbm_bits" (uint8 bits).
    """
    B, S, D = x.shape
    use_dropout = bool(training) and p > 0.0
    if use_dropout and p >= 1.0:          # guard: 1/(1-p) diverges; torch gives zeros
        return jnp.zeros_like(x)

    rows, lanes, folded = _fold_layout(S, D)
    xw = x.reshape(B, rows, lanes) if folded else x
    pe_w = pe[:S, :].astype(x.dtype)      # ship pe in x's dtype (halves pe DMA for bf16)
    if folded:
        pe_w = pe_w.reshape(rows, lanes)

    if rng_impl is None:
        rng_impl = "pallas" if jax.devices()[0].platform == "tpu" else "hbm_bits"
    bits_itemsize = 1 if (use_dropout and rng_impl == "hbm_bits") else 0

    tile_rows = _pick_tile_rows(rows, lanes, x.dtype.itemsize, bits_itemsize)
    n_row_tiles = pl.cdiv(rows, tile_rows)
    # v7x megacore: ensure >= 2 grid steps on a parallel axis when possible.
    if n_row_tiles * B < 2:
        cand = max(_ROW_ALIGN, pl.cdiv(pl.cdiv(rows, 2), _ROW_ALIGN) * _ROW_ALIGN)
        if cand < rows:
            tile_rows = cand
            n_row_tiles = pl.cdiv(rows, tile_rows)

    grid = (n_row_tiles, B)               # pe tile resident across the inner batch loop
    x_spec = pl.BlockSpec((None, tile_rows, lanes), lambda r, b: (b, r, 0))
    pe_spec = pl.BlockSpec((tile_rows, lanes), lambda r, b: (r, 0))
    out_spec = pl.BlockSpec((None, tile_rows, lanes), lambda r, b: (b, r, 0))
    compiler_params = pltpu.CompilerParams(
        dimension_semantics=("parallel", "parallel"),
        vmem_limit_bytes=_VMEM_LIMIT_BYTES,
    )
    out_shape = jax.ShapeDtypeStruct(xw.shape, x.dtype)

    if not use_dropout:
        out = pl.pallas_call(
            _add_pe_kernel, out_shape=out_shape, grid=grid,
            in_specs=[x_spec, pe_spec], out_specs=out_spec,
            compiler_params=compiler_params,
        )(xw, pe_w)
    else:
        if rng_key is None:
            rng_key = jax.random.PRNGKey(0)   # footgun: pass a fresh key per call
        scale = 1.0 / (1.0 - float(p))
        if rng_impl == "pallas":
            keep_thr = int(round((1.0 - float(p)) * float(1 << 24)))
            seed = jax.random.randint(rng_key, (1,), 0, 2 ** 31 - 1, dtype=jnp.int32)
            kernel = functools.partial(_add_pe_dropout_prng_kernel,
                                       keep_thr=keep_thr, scale=scale)
            seed_spec = pl.BlockSpec(memory_space=pltpu.MemorySpace.SMEM)
            out = pl.pallas_call(
                kernel, out_shape=out_shape, grid=grid,
                in_specs=[seed_spec, x_spec, pe_spec], out_specs=out_spec,
                compiler_params=compiler_params,
            )(seed, xw, pe_w)
        else:
            keep_thr = int(round((1.0 - float(p)) * 256.0))
            bits = jax.random.bits(rng_key, xw.shape, dtype=jnp.uint8)
            bits_spec = pl.BlockSpec((None, tile_rows, lanes), lambda r, b: (b, r, 0))
            kernel = functools.partial(_add_pe_dropout_bits_kernel,
                                       keep_thr=keep_thr, scale=scale)
            out = pl.pallas_call(
                kernel, out_shape=out_shape, grid=grid,
                in_specs=[x_spec, pe_spec, bits_spec], out_specs=out_spec,
                compiler_params=compiler_params,
            )(xw, pe_w, bits)

    return out.reshape(B, S, D) if folded else out


# ----------------------------------------------------------------------------
# Demo / self-check
# ----------------------------------------------------------------------------
if __name__ == "__main__":
    key = jax.random.PRNGKey(0)
    k_x, k_drop = jax.random.split(key)

    batch, seq_len, d_model = 2, 8, 32
    x = jax.random.normal(k_x, (batch, seq_len, d_model), dtype=jnp.float32)

    pe = make_positional_encoding_table(d_model, max_len=5000)
    ref = x + pe[None, :seq_len, :]

    # Eval mode: dropout is identity -> exact check against the reference.
    y_eval = jax.block_until_ready(positional_encoding(x, pe, p=0.3, training=False))
    assert y_eval.shape == (batch, seq_len, d_model)
    assert jnp.allclose(y_eval, ref, atol=1e-6, rtol=1e-6), "eval-mode mismatch"

    # Training mode: each element must be 0 (dropped) or ref / (1 - p) (kept).
    p = 0.3
    y_train = jax.block_until_ready(
        positional_encoding(x, pe, p=p, training=True, rng_key=k_drop))
    assert y_train.shape == (batch, seq_len, d_model)
    scaled = ref / (1.0 - p)
    dropped = jnp.isclose(y_train, 0.0, atol=1e-6)
    kept = jnp.isclose(y_train, scaled, atol=1e-4, rtol=1e-4)
    assert bool(jnp.all(jnp.logical_or(dropped, kept))), "training-mode values inconsistent"
    keep_frac = float(jnp.mean(kept.astype(jnp.float32)))
    assert 0.35 < keep_frac < 0.98, f"implausible keep fraction {keep_frac}"

    print("KERNEL_OK")
</pallas_src>

<mosaic_0001>
module attributes {stable_mosaic.version = 11 : i64} {
  func.func @_add_pe_kernel(%arg0: i32, %arg1: i32, %arg2: memref<1x2x128xf32, #tpu.memory_space<vmem>>, %arg3: memref<2x128xf32, #tpu.memory_space<vmem>>, %arg4: memref<1x2x128xf32, #tpu.memory_space<vmem>>) attributes {dimension_semantics = [#tpu.dimension_semantics<parallel>, #tpu.dimension_semantics<parallel>], iteration_bounds = array<i64: 1, 2>, scalar_prefetch = 0 : i64, scratch_operands = 0 : i64, tpu.core_type = #tpu.core_type<tc>, window_params = [{transform_indices = @transform_0, window_bounds = array<i64: 1, 2, 128>}, {transform_indices = @transform_1, window_bounds = array<i64: 2, 128>}, {transform_indices = @transform_2, window_bounds = array<i64: 1, 2, 128>}]} {
    %c0 = arith.constant 0 : index
    %c0_0 = arith.constant 0 : index
    %c0_1 = arith.constant 0 : index
    %0 = vector.load %arg2[%c0, %c0_0, %c0_1] : memref<1x2x128xf32, #tpu.memory_space<vmem>>, vector<1x2x128xf32>
    %1 = vector.shape_cast %0 : vector<1x2x128xf32> to vector<2x128xf32>
    %c0_2 = arith.constant 0 : index
    %c0_3 = arith.constant 0 : index
    %2 = vector.load %arg3[%c0_2, %c0_3] : memref<2x128xf32, #tpu.memory_space<vmem>>, vector<2x128xf32>
    %3 = arith.addf %1, %2 : vector<2x128xf32>
    %c0_4 = arith.constant 0 : index
    %c0_5 = arith.constant 0 : index
    %c0_6 = arith.constant 0 : index
    %4 = vector.load %arg4[%c0_4, %c0_5, %c0_6] : memref<1x2x128xf32, #tpu.memory_space<vmem>>, vector<1x2x128xf32>
    %5 = vector.shape_cast %4 : vector<1x2x128xf32> to vector<2x128xf32>
    %6 = vector.shape_cast %3 : vector<2x128xf32> to vector<1x2x128xf32>
    tpu.vector_store %arg4[%c0_4, %c0_5, %c0_6], %6 {strides = array<i32>} : memref<1x2x128xf32, #tpu.memory_space<vmem>>, vector<1x2x128xf32>,
    return
  }
  func.func @transform_0(%arg0: i32, %arg1: i32) -> (i32, i32, i32) {
    %c0_i32 = arith.constant 0 : i32
    %c0_i32_0 = arith.constant 0 : i32
    return %arg1, %arg0, %c0_i32 : i32, i32, i32
  }
  func.func @transform_1(%arg0: i32, %arg1: i32) -> (i32, i32) {
    %c0_i32 = arith.constant 0 : i32
    %c0_i32_0 = arith.constant 0 : i32
    return %arg0, %c0_i32 : i32, i32
  }
  func.func @transform_2(%arg0: i32, %arg1: i32) -> (i32, i32, i32) {
    %c0_i32 = arith.constant 0 : i32
    %c0_i32_0 = arith.constant 0 : i32
    return %arg1, %arg0, %c0_i32 : i32, i32, i32
  }
}

</mosaic_0001>

<llo_original>
// kernel: tpu_custom_call.1
$region0: #{tpu_custom_call.1}
  #allocation0 [shape = 'u32[]', space=smem, size = 0x4, offset = 0x4, fixed_abs, tag = 'smem constant byte address 0x4 - core index']
  #allocation1 [shape = 'u32[144,128]{1,0:T(1,128)}', space=vmem, size = 0x12000, scoped, tag = 'internal scratch']
  %s0 = inlined_call_operand.hbm [shape: f32[2,2,128], index: 0, kind: input, shape index: {}]
  %s1 = inlined_call_operand.vmem [shape: f32[2,128], index: 1, kind: input, shape index: {}]
  %s2 = inlined_call_operand.hbm [shape: f32[2,2,128], index: 2, kind: output, shape index: {}]
  %s3 = sld [smem:[#allocation0]]
  $region45: #{tpu_custom_call.1} parent=0
    _
  %s5 = ssub.s32 1, %s3
  %s6 = scalar_select 0, %s5, %s3
  $region1: #{tpu_custom_call.1} parent=0
    #allocation2 [shape = 'u8[2048]{0}', space=vmem, size = 0x800, scoped, tag = 'input window, operand 0']
    #allocation3 [shape = 's32[2]{0}', space=sflag, size = 0x8, scoped, tag = 'scoped memory for tpu_custom_call.1']
    #allocation4 [shape = 's32[2]{0}', space=sflag, size = 0x8, scoped, tag = 'scoped memory for tpu_custom_call.1']
    #allocation5 [shape = 'u8[2048]{0}', space=vmem, size = 0x800, scoped, tag = 'output window, operand 0']
    %7 = vsyncpa [#allocation3], 0
    %s8 = scalar_lea.sflag [#allocation3], 1
    %9 = vsyncpa %s8, 0
    %10 = vsyncpa [#allocation4], 0
    %s11 = scalar_lea.sflag [#allocation4], 1
    %12 = vsyncpa %s11, 0
    loop: start=0, step=1, limit=4
    $region2: #{tpu_custom_call.1} parent=1 // loop_pre_header
      _
    $region3: #{tpu_custom_call.1} parent=1 // loop_header
      %s14 = sphi 0, %s18
      %p15 = scmp.ge.s32.totalorder %s14, 4
      %s21 = sphi 0, %s33
      %s22 = sphi 0, %s29
      %s23 = sphi 0, %s21
      %s24 = sphi 0, %s22
      %s25 = sphi 0, %s23
      %s26 = sphi 0, %s24
      %s38 = sphi 0, %s40
      %s41 = sphi 0, %s38
      %s42 = sphi 0, %s41
      %s58 = sphi 0, %s42
      %s64 = sphi 0, %s66
      %s67 = sphi 0, %s64
      %s68 = sphi 0, %s67
      %s84 = sphi 0, %s68
      %s92 = sphi 0, %s94
      %s95 = sphi 0, %s92
      %s96 = sphi 0, %s95
      %s112 = sphi 0, %s96
    $region4: #{tpu_custom_call.1} parent=1 // loop_header_branch
      %17 = sbr.rel (%p15) target = $region8
    $region5: #{tpu_custom_call.1} parent=1 // loop_body
      %s19 = ssub.s32 %s14, 1
      %s20 = ssub.s32 %s14, 2
      %s27 = sadd.s32 1, %s22
      %p28 = scmp.ge.s32.totalorder %s27, 2
      %s29 = scalar_select %p28, 0, %s27
      %s30 = sadd.s32 1, %s21
      %s31 = scalar_select %p28, %s30, %s21
      %p32 = scmp.ge.s32.totalorder %s31, 1
      %s33 = scalar_select %p32, 0, %s31
      %s34 = ssub.s32 %s22, %s29
      %s35 = ssub.s32 %s21, %s33
      %s36 = sor.u32 %s34, %s35
      %p37 = scmp.eq.s32.totalorder %s36, 0
      %s39 = sadd.s32 %s38, 1
      %s40 = scalar_select %p37, %s38, %s39
      %p43 = pneg %p37
      %p44 = scmp.eq.s32.totalorder %s14, 1
      %p45 = por %p43, %p44
      %p46 = scmp.ne.s32.totalorder %s38, %s41
      %p47 = scmp.eq.s32.totalorder %s14, 0
      %p48 = por %p46, %p47
      %p49 = scmp.ne.s32.totalorder %s38, %s41
      %p50 = scmp.eq.s32.totalorder %s19, 1
      %p51 = por %p49, %p50
      %p52 = scmp.ne.s32.totalorder %s41, %s42
      %p53 = scmp.eq.s32.totalorder %s19, 0
      %p54 = por %p52, %p53
      %p55 = scmp.ne.s32.totalorder %s41, %s42
      %p56 = scmp.eq.s32.totalorder %s20, 1
      %p57 = por %p55, %p56
      %p59 = scmp.ne.s32.totalorder %s42, %s58
      %p60 = scmp.eq.s32.totalorder %s20, 0
      %p61 = por %p59, %p60
      %s62 = ssub.s32 %s21, %s33
      %p63 = scmp.eq.s32.totalorder %s62, 0
      %s65 = sadd.s32 %s64, 1
      %s66 = scalar_select %p63, %s64, %s65
      %p69 = pneg %p63
      %p70 = scmp.eq.s32.totalorder %s14, 1
      %p71 = por %p69, %p70
      %p72 = scmp.ne.s32.totalorder %s64, %s67
      %p73 = scmp.eq.s32.totalorder %s14, 0
      %p74 = por %p72, %p73
      %p75 = scmp.ne.s32.totalorder %s64, %s67
      %p76 = scmp.eq.s32.totalorder %s19, 1
      %p77 = por %p75, %p76
      %p78 = scmp.ne.s32.totalorder %s67, %s68
      %p79 = scmp.eq.s32.totalorder %s19, 0
      %p80 = por %p78, %p79
      %p81 = scmp.ne.s32.totalorder %s67, %s68
      %p82 = scmp.eq.s32.totalorder %s20, 1
      %p83 = por %p81, %p82
      %p85 = scmp.ne.s32.totalorder %s68, %s84
      %p86 = scmp.eq.s32.totalorder %s20, 0
      %p87 = por %p85, %p86
      %s88 = ssub.s32 %s22, %s29
      %s89 = ssub.s32 %s21, %s33
      %s90 = sor.u32 %s88, %s89
      %p91 = scmp.eq.s32.totalorder %s90, 0
      %s93 = sadd.s32 %s92, 1
      %s94 = scalar_select %p91, %s92, %s93
      %p97 = pneg %p91
      %p98 = scmp.eq.s32.totalorder %s14, 1
      %p99 = por %p97, %p98
      %p100 = scmp.ne.s32.totalorder %s92, %s95
      %p101 = scmp.eq.s32.totalorder %s14, 0
      %p102 = por %p100, %p101
      %p103 = scmp.ne.s32.totalorder %s92, %s95
      %p104 = scmp.eq.s32.totalorder %s19, 1
      %p105 = por %p103, %p104
      %p106 = scmp.ne.s32.totalorder %s95, %s96
      %p107 = scmp.eq.s32.totalorder %s19, 0
      %p108 = por %p106, %p107
      %p109 = scmp.ne.s32.totalorder %s95, %s96
      %p110 = scmp.eq.s32.totalorder %s20, 1
      %p111 = por %p109, %p110
      %p113 = scmp.ne.s32.totalorder %s96, %s112
      %p114 = scmp.eq.s32.totalorder %s20, 0
      %p115 = por %p113, %p114
      %p116 = scmp.le.s32.totalorder 1, %s14
      %p117 = scmp.lt.s32.totalorder %s14, 3
      %p118 = pnand %p116, %p117
      %p119 = pneg %p118
      // Predicated region
      $region9: #{tpu_custom_call.1} parent=5 // pred_check
        _
      $region10: #{tpu_custom_call.1} parent=5 // pred_check_branch
        %121 = sbr.rel (%p118) target = $region12
      $region11: #{tpu_custom_call.1} parent=5 // pred_region
        %s122 = ssub.s32 %s14, 1
        // Predicated region
        $region13: #{tpu_custom_call.1} parent=11 // pred_check
          %p123 = pneg %p80
        $region14: #{tpu_custom_call.1} parent=11 // pred_check_branch
          %125 = sbr.rel (%p123) target = $region16
        $region15: #{tpu_custom_call.1} parent=11 // pred_region
          %p126 = scmp.lt.s32.totalorder %s23, 0
          %s127 = scalar_select %p126, %s23, 0
          %s128 = smul.addr %s127, 2
          %s129 = scalar_lea.vmem %s1, %s128
        $region16: #{tpu_custom_call.1} parent=11 // pred_fallthru
          _
      $region12: #{tpu_custom_call.1} parent=5 // pred_fallthru
        _
      %p130 = scmp.lt.s32.totalorder %s14, 2
      // Predicated region
      $region17: #{tpu_custom_call.1} parent=5 // pred_check
        %p131 = pneg %p130
      $region18: #{tpu_custom_call.1} parent=5 // pred_check_branch
        %133 = sbr.rel (%p131) target = $region20
      $region19: #{tpu_custom_call.1} parent=5 // pred_region
        // Predicated region
        $region21: #{tpu_custom_call.1} parent=19 // pred_check
          %p134 = pneg %p48
        $region22: #{tpu_custom_call.1} parent=19 // pred_check_branch
          %136 = sbr.rel (%p134) target = $region24
        $region23: #{tpu_custom_call.1} parent=19 // pred_region
          %s137 = sand.u32 %s38, 1
          %s138 = scalar_lea.sflag [#allocation3], %s137
          %s139 = sand.u32 %s38, 1
          %s140 = smul.addr %s139, 2
          %s141 = scalar_lea.vmem [#allocation2], %s140
          %s143 = ssub.s32 32, 32
          %144 = vsyncadd %s138, %s143
          %s145 = sadd.s32 %s21, %s22
          %s146 = smul.addr %s145, 32
          %s147 = scalar_lea.hbm %s0, %s146
          %s149 = sshll.u32 %s141, 4
          %s150 = int_to_ptr.vmem [resolvable:$true] %s149
          %152 = dma.hbm_to_vmem [thread:$0]  %s147, 32, %s150, %s138
        $region24: #{tpu_custom_call.1} parent=19 // pred_fallthru
          _
      $region20: #{tpu_custom_call.1} parent=5 // pred_fallthru
        _
      %p153 = scmp.le.s32.totalorder 1, %s14
      %p154 = scmp.lt.s32.totalorder %s14, 3
      %p155 = pnand %p153, %p154
      %p156 = pneg %p155
      // Predicated region
      $region25: #{tpu_custom_call.1} parent=5 // pred_check
        _
      $region26: #{tpu_custom_call.1} parent=5 // pred_check_branch
        %158 = sbr.rel (%p155) target = $region28
      $region27: #{tpu_custom_call.1} parent=5 // pred_region
        %s159 = ssub.s32 %s14, 1
        %s160 = sand.u32 %s41, 1
        %s161 = scalar_lea.sflag [#allocation3], %s160
        %s162 = sand.u32 %s41, 1
        %s163 = smul.addr %s162, 2
        %s164 = scalar_lea.vmem [#allocation2], %s163
        // Predicated region
        $region29: #{tpu_custom_call.1} parent=27 // pred_check
          %p165 = pneg %p54
        $region30: #{tpu_custom_call.1} parent=27 // pred_check_branch
          %167 = sbr.rel (%p165) target = $region32
        $region31: #{tpu_custom_call.1} parent=27 // pred_region
          %168 = dma.done %s161, 32
        $region32: #{tpu_custom_call.1} parent=27 // pred_fallthru
          _
        %s169 = sand.u32 %s41, 1
        %s170 = scalar_lea.sflag [#allocation3], %s169
        %s171 = sand.u32 %s41, 1
        %s172 = smul.addr %s171, 2
        %s173 = scalar_lea.vmem [#allocation2], %s172
        %p174 = pneg %p54
        %p175 = pneg %p51
        %p176 = scmp.lt.s32.totalorder %s23, 0
        %s177 = scalar_select %p176, %s23, 0
        %s178 = smul.addr %s177, 2
        %s179 = scalar_lea.vmem %s1, %s178
        %p180 = pneg %p80
        %p181 = pneg %p77
        %p182 = pneg %p108
        %p183 = pneg %p105
        %s184 = sand.u32 %s95, 1
        %s185 = scalar_lea.sflag [#allocation4], %s184
        %s186 = sand.u32 %s95, 1
        %s187 = smul.addr %s186, 2
        %s188 = scalar_lea.vmem [#allocation5], %s187
        %p189 = scmp.lt.s32.totalorder %s23, 0
        %s190 = scalar_select %p189, %s23, 0
        %s191 = smul.addr %s190, 2
        %s192 = scalar_lea.vmem %s1, %s191
        %v193 = vld [vmem:[%s164] sm:$0x3]
        %v194 = vld [vmem:[%s192] sm:$0x3]
        %v195 = vadd.f32 %v193, %v194
        %196 = vst [vmem:[%s188] sm:$0x3] %v195
        %s197 = sand.u32 %s95, 1
        %s198 = scalar_lea.sflag [#allocation4], %s197
        %s199 = sand.u32 %s95, 1
        %s200 = smul.addr %s199, 2
        %s201 = scalar_lea.vmem [#allocation5], %s200
        // Predicated region
        $region33: #{tpu_custom_call.1} parent=27 // pred_check
          %p202 = pneg %p105
        $region34: #{tpu_custom_call.1} parent=27 // pred_check_branch
          %204 = sbr.rel (%p202) target = $region36
        $region35: #{tpu_custom_call.1} parent=27 // pred_region
          %s206 = ssub.s32 32, 32
          %207 = vsyncadd %s198, %s206
          %s208 = sadd.s32 %s23, %s24
          %s209 = smul.addr %s208, 32
          %s210 = scalar_lea.hbm %s2, %s209
          %s212 = sshll.u32 %s201, 4
          %s213 = int_to_ptr.vmem [resolvable:$true] %s212
          %215 = dma.vmem_to_hbm [thread:$0]  %s213, 32, %s210, %s198
        $region36: #{tpu_custom_call.1} parent=27 // pred_fallthru
          _
      $region28: #{tpu_custom_call.1} parent=5 // pred_fallthru
        _
      %p216 = scmp.le.s32.totalorder 2, %s14
      // Predicated region
      $region37: #{tpu_custom_call.1} parent=5 // pred_check
        %p217 = pneg %p216
      $region38: #{tpu_custom_call.1} parent=5 // pred_check_branch
        %219 = sbr.rel (%p217) target = $region40
      $region39: #{tpu_custom_call.1} parent=5 // pred_region
        %s220 = ssub.s32 %s14, 2
        // Predicated region
        $region41: #{tpu_custom_call.1} parent=39 // pred_check
          %p221 = pneg %p111
        $region42: #{tpu_custom_call.1} parent=39 // pred_check_branch
          %223 = sbr.rel (%p221) target = $region44
        $region43: #{tpu_custom_call.1} parent=39 // pred_region
          %s224 = sand.u32 %s96, 1
          %s225 = scalar_lea.sflag [#allocation4], %s224
          %s226 = sand.u32 %s96, 1
          %s227 = smul.addr %s226, 2
          %s228 = scalar_lea.vmem [#allocation5], %s227
          %229 = dma.done %s225, 32
        $region44: #{tpu_custom_call.1} parent=39 // pred_fallthru
          _
      $region40: #{tpu_custom_call.1} parent=5 // pred_fallthru
        _
    $region6: #{tpu_custom_call.1} parent=1 // loop_footer
      %s18 = sadd.s32 1, %s14
    $region7: #{tpu_custom_call.1} parent=1 // loop_footer_branch
      %13 = sbr.rel target = $region3
    $region8: #{tpu_custom_call.1} parent=1 // loop_exit
      _
    %230 = vsyncpa [#allocation3], 1
    %s231 = scalar_lea.sflag [#allocation3], 1
    %232 = vsyncpa %s231, 1
    %233 = vsyncpa [#allocation4], 1
    %s234 = scalar_lea.sflag [#allocation4], 1
    %235 = vsyncpa %s234, 1

</llo_original>
